<compile_context>
chip_gen: v7x
topology: tpu7x:2x2x1
jax: 0.10.0
libtpu: 0.0.40
codegen_flags: <defaults>
</compile_context>

<pallas_src>
import jax
import jax.numpy as jnp
from jax.experimental import pallas as pl
from jax.experimental.pallas import tpu as pltpu


def _round_up(x, m):
    return ((x + m - 1) // m) * m


# ---------------------------------------------------------------------------
# Kernel: full 3-layer MLP on one batch tile, everything resident in VMEM.
# ---------------------------------------------------------------------------
def shape_mapper_kernel(x_ref, w1_ref, b1_ref, w2_ref, b2_ref, w3_ref, b3_ref,
                        o_ref):
    # x arrives f32; cast to bf16 on the VPU (hidden under MXU work) so the
    # HBM read stays a single f32 pass with no wrapper-side cast kernel.
    x = x_ref[...].astype(jnp.bfloat16)                          # (tile_b, in)

    h1 = jnp.dot(x, w1_ref[...],
                 preferred_element_type=jnp.float32) + b1_ref[...]
    h1 = jnp.maximum(h1, 0.2 * h1)                               # LeakyReLU(0.2), f32

    h2 = jnp.dot(h1.astype(jnp.bfloat16), w2_ref[...],
                 preferred_element_type=jnp.float32) + b2_ref[...]
    h2 = jnp.maximum(h2, 0.2 * h2)                               # LeakyReLU(0.2), f32

    out = jnp.dot(h2.astype(jnp.bfloat16), w3_ref[...],
                  preferred_element_type=jnp.float32) + b3_ref[...]
    o_ref[...] = out.astype(o_ref.dtype)                         # lane-dense store


# ---------------------------------------------------------------------------
# One-time parameter prep (hoisted out of the per-call forward).
# ---------------------------------------------------------------------------
def prepare_params(params):
    """Pre-cast weights to bf16 and lane-pad the final layer once.

    Do this once (outside the NeRF inner loop); the forward then launches a
    single Pallas kernel with no auxiliary XLA cast/pad kernels.
    """
    output_dim = params["w3"].shape[1]
    out_pad = _round_up(output_dim, 128)

    w3, b3 = params["w3"], params["b3"]
    if out_pad != output_dim:
        w3 = jnp.pad(w3, ((0, 0), (0, out_pad - output_dim)))
        b3 = jnp.pad(b3, ((0, 0), (0, out_pad - output_dim)))

    return {
        "w1": params["w1"].astype(jnp.bfloat16), "b1": params["b1"],
        "w2": params["w2"].astype(jnp.bfloat16), "b2": params["b2"],
        "w3": w3.astype(jnp.bfloat16),           "b3": b3,
        "output_dim": output_dim,
        "out_pad": out_pad,
    }


def _choose_tile_b(B, tile_b_max, mult=128):
    """MXU-friendly batch tile: multiple of 128, capped at tile_b_max.

    Only splits into >=2 grid steps (for the two v7x TensorCores) when the
    split costs no additional row padding (b_pad divisible by 2*mult).
    """
    b_pad = _round_up(B, mult)
    t = min(_round_up(tile_b_max, mult), b_pad)
    if b_pad // t < 2 and b_pad >= 2 * mult and b_pad % (2 * mult) == 0:
        t = b_pad // 2
    return t


# ---------------------------------------------------------------------------
# Forward wrapper: one pallas_call, batch-tiled over a 1-D grid.
# ---------------------------------------------------------------------------
def shape_mapper_forward(x, prepared, *, tile_b=1024,
                         out_dtype=jnp.float32, return_padded=False):
    """x: (B, input_dim) f32.  prepared: output of prepare_params()."""
    B, input_dim = x.shape
    w1, b1 = prepared["w1"], prepared["b1"]
    w2, b2 = prepared["w2"], prepared["b2"]
    w3, b3 = prepared["w3"], prepared["b3"]
    output_dim = prepared["output_dim"]
    out_pad = prepared["out_pad"]

    # Batch tiling: pad rows up to a multiple of the tile (no divisibility assert).
    tile_b_eff = _choose_tile_b(B, tile_b)
    B_pad = _round_up(B, tile_b_eff)
    if B_pad != B:
        x = jnp.pad(x, ((0, B_pad - B), (0, 0)))
    grid = (B_pad // tile_b_eff,)

    def rep(shape):
        # Weight/bias blocks: full array, same block every grid step -> resident.
        # (Single-buffering via pipeline_mode=pl.Buffered(1) would save ~1 MiB
        #  on v7x; not needed at this footprint.)
        return pl.BlockSpec(shape, lambda i: (0, 0))

    out = pl.pallas_call(
        shape_mapper_kernel,
        out_shape=jax.ShapeDtypeStruct((B_pad, out_pad), out_dtype),
        grid_spec=pl.GridSpec(
            grid=grid,
            in_specs=[
                pl.BlockSpec((tile_b_eff, input_dim), lambda i: (i, 0)),  # x tile (f32)
                rep(w1.shape), rep(b1.shape),
                rep(w2.shape), rep(b2.shape),
                rep(w3.shape), rep(b3.shape),
            ],
            out_specs=pl.BlockSpec((tile_b_eff, out_pad), lambda i: (i, 0)),
        ),
        compiler_params=pltpu.CompilerParams(
            dimension_semantics=("parallel",),
            # ~5 MiB at tile_b=1024; 32 MiB leaves room up to tile_b~2048 and
            # stays inside v7x's 64 MiB physical VMEM.
            vmem_limit_bytes=32 * 1024 * 1024,
        ),
    )(x, w1, b1, w2, b2, w3, b3)

    if return_padded:
        return out                      # lane-dense (B_pad, out_pad) slab
    if out_pad == output_dim:
        return out[:B]                  # row slice only (cheap)
    return out[:B, :output_dim]


# ---------------------------------------------------------------------------
# Synthetic params + plain-JAX reference (mirrors bf16-in / f32-accumulate).
# ---------------------------------------------------------------------------
def init_params(key, input_dim, output_dim):
    ks = jax.random.split(key, 6)

    def lin(kw, kb, fan_in, fan_out):
        bound = 1.0 / jnp.sqrt(fan_in)
        w = jax.random.uniform(kw, (fan_in, fan_out), jnp.float32, -bound, bound)
        b = jax.random.uniform(kb, (1, fan_out), jnp.float32, -bound, bound)
        return w, b

    w1, b1 = lin(ks[0], ks[1], input_dim, 512)
    w2, b2 = lin(ks[2], ks[3], 512, 256)
    w3, b3 = lin(ks[4], ks[5], 256, output_dim)
    return {"w1": w1, "b1": b1, "w2": w2, "b2": b2, "w3": w3, "b3": b3}


def reference_forward(x, p):
    def lrelu(v):
        return jnp.maximum(v, 0.2 * v)

    def mm(a, w):
        return jnp.dot(a.astype(jnp.bfloat16), w.astype(jnp.bfloat16),
                       preferred_element_type=jnp.float32)

    h = lrelu(mm(x, p["w1"]) + p["b1"])
    h = lrelu(mm(h, p["w2"]) + p["b2"])
    return mm(h, p["w3"]) + p["b3"]


if __name__ == "__main__":
    key = jax.random.PRNGKey(0)
    k_x, k_p = jax.random.split(key)

    B, input_dim, output_dim = 16, 32, 64
    x = jax.random.normal(k_x, (B, input_dim), dtype=jnp.float32)
    params = init_params(k_p, input_dim, output_dim)

    prepared = prepare_params(params)            # one-time cast + pad
    out = shape_mapper_forward(x, prepared)
    out = jax.block_until_ready(out)

    ref = reference_forward(x, params)
    assert out.shape == (B, output_dim)
    # bf16 MXU inputs -> compare against a bf16-mirroring reference; tolerance
    # covers accumulation-order differences only.
    assert jnp.allclose(out, ref, atol=1e-2, rtol=1e-2), "mismatch vs JAX reference"

    print("KERNEL_OK")
</pallas_src>

<mosaic_0001>
module attributes {stable_mosaic.version = 11 : i64} {
  func.func @shape_mapper_kernel(%arg0: i32, %arg1: memref<128x32xf32, #tpu.memory_space<vmem>>, %arg2: memref<32x512xbf16, #tpu.memory_space<vmem>>, %arg3: memref<1x512xf32, #tpu.memory_space<vmem>>, %arg4: memref<512x256xbf16, #tpu.memory_space<vmem>>, %arg5: memref<1x256xf32, #tpu.memory_space<vmem>>, %arg6: memref<256x128xbf16, #tpu.memory_space<vmem>>, %arg7: memref<1x128xf32, #tpu.memory_space<vmem>>, %arg8: memref<128x128xf32, #tpu.memory_space<vmem>>) attributes {dimension_semantics = [#tpu.dimension_semantics<parallel>], iteration_bounds = array<i64: 1>, scalar_prefetch = 0 : i64, scratch_operands = 0 : i64, tpu.core_type = #tpu.core_type<tc>, window_params = [{transform_indices = @transform_0, window_bounds = array<i64: 128, 32>}, {pipeline_mode = #tpu.pipeline_mode<synchronous>, transform_indices = @transform_1, window_bounds = array<i64: 32, 512>}, {pipeline_mode = #tpu.pipeline_mode<synchronous>, transform_indices = @transform_2, window_bounds = array<i64: 1, 512>}, {pipeline_mode = #tpu.pipeline_mode<synchronous>, transform_indices = @transform_3, window_bounds = array<i64: 512, 256>}, {pipeline_mode = #tpu.pipeline_mode<synchronous>, transform_indices = @transform_4, window_bounds = array<i64: 1, 256>}, {pipeline_mode = #tpu.pipeline_mode<synchronous>, transform_indices = @transform_5, window_bounds = array<i64: 256, 128>}, {pipeline_mode = #tpu.pipeline_mode<synchronous>, transform_indices = @transform_6, window_bounds = array<i64: 1, 128>}, {transform_indices = @transform_7, window_bounds = array<i64: 128, 128>}]} {
    %c0 = arith.constant 0 : index
    %c0_0 = arith.constant 0 : index
    %0 = vector.load %arg1[%c0, %c0_0] : memref<128x32xf32, #tpu.memory_space<vmem>>, vector<128x32xf32>
    %1 = arith.truncf %0 : vector<128x32xf32> to vector<128x32xbf16>
    %c0_1 = arith.constant 0 : index
    %c0_2 = arith.constant 0 : index
    %2 = vector.load %arg2[%c0_1, %c0_2] : memref<32x512xbf16, #tpu.memory_space<vmem>>, vector<32x512xbf16>
    %cst = arith.constant dense<0.000000e+00> : vector<128x512xf32>
    %3 = tpu.matmul %1, %2, %cst {dimension_numbers = #tpu.dot_dimension_numbers<[1], [0], [0], [1], [0, 0, 1, 1], [], []>} : vector<128x32xbf16>, vector<32x512xbf16>, vector<128x512xf32> -> vector<128x512xf32>
    %c0_3 = arith.constant 0 : index
    %c0_4 = arith.constant 0 : index
    %4 = vector.load %arg3[%c0_3, %c0_4] : memref<1x512xf32, #tpu.memory_space<vmem>>, vector<1x512xf32>
    %5 = vector.broadcast %4 : vector<1x512xf32> to vector<128x512xf32>
    %6 = arith.addf %3, %5 : vector<128x512xf32>
    %cst_5 = arith.constant 2.000000e-01 : f32
    %7 = vector.broadcast %cst_5 : f32 to vector<128x512xf32>
    %8 = arith.mulf %7, %6 : vector<128x512xf32>
    %9 = arith.maximumf %6, %8 : vector<128x512xf32>
    %10 = arith.truncf %9 : vector<128x512xf32> to vector<128x512xbf16>
    %c0_6 = arith.constant 0 : index
    %c0_7 = arith.constant 0 : index
    %11 = vector.load %arg4[%c0_6, %c0_7] : memref<512x256xbf16, #tpu.memory_space<vmem>>, vector<512x256xbf16>
    %cst_8 = arith.constant dense<0.000000e+00> : vector<128x256xf32>
    %12 = tpu.matmul %10, %11, %cst_8 {dimension_numbers = #tpu.dot_dimension_numbers<[1], [0], [0], [1], [0, 0, 1, 1], [], []>} : vector<128x512xbf16>, vector<512x256xbf16>, vector<128x256xf32> -> vector<128x256xf32>
    %c0_9 = arith.constant 0 : index
    %c0_10 = arith.constant 0 : index
    %13 = vector.load %arg5[%c0_9, %c0_10] : memref<1x256xf32, #tpu.memory_space<vmem>>, vector<1x256xf32>
    %14 = vector.broadcast %13 : vector<1x256xf32> to vector<128x256xf32>
    %15 = arith.addf %12, %14 : vector<128x256xf32>
    %cst_11 = arith.constant 2.000000e-01 : f32
    %16 = vector.broadcast %cst_11 : f32 to vector<128x256xf32>
    %17 = arith.mulf %16, %15 : vector<128x256xf32>
    %18 = arith.maximumf %15, %17 : vector<128x256xf32>
    %19 = arith.truncf %18 : vector<128x256xf32> to vector<128x256xbf16>
    %c0_12 = arith.constant 0 : index
    %c0_13 = arith.constant 0 : index
    %20 = vector.load %arg6[%c0_12, %c0_13] : memref<256x128xbf16, #tpu.memory_space<vmem>>, vector<256x128xbf16>
    %cst_14 = arith.constant dense<0.000000e+00> : vector<128x128xf32>
    %21 = tpu.matmul %19, %20, %cst_14 {dimension_numbers = #tpu.dot_dimension_numbers<[1], [0], [0], [1], [0, 0, 1, 1], [], []>} : vector<128x256xbf16>, vector<256x128xbf16>, vector<128x128xf32> -> vector<128x128xf32>
    %c0_15 = arith.constant 0 : index
    %c0_16 = arith.constant 0 : index
    %22 = vector.load %arg7[%c0_15, %c0_16] : memref<1x128xf32, #tpu.memory_space<vmem>>, vector<1x128xf32>
    %23 = vector.broadcast %22 : vector<1x128xf32> to vector<128x128xf32>
    %24 = arith.addf %21, %23 : vector<128x128xf32>
    %c0_17 = arith.constant 0 : index
    %c0_18 = arith.constant 0 : index
    %25 = vector.load %arg8[%c0_17, %c0_18] : memref<128x128xf32, #tpu.memory_space<vmem>>, vector<128x128xf32>
    tpu.vector_store %arg8[%c0_17, %c0_18], %24 {strides = array<i32>} : memref<128x128xf32, #tpu.memory_space<vmem>>, vector<128x128xf32>,
    return
  }
  func.func @transform_0(%arg0: i32) -> (i32, i32) {
    %c0_i32 = arith.constant 0 : i32
    %c0_i32_0 = arith.constant 0 : i32
    return %arg0, %c0_i32 : i32, i32
  }
  func.func @transform_1(%arg0: i32) -> (i32, i32) {
    %c0_i32 = arith.constant 0 : i32
    %c0_i32_0 = arith.constant 0 : i32
    %c0_i32_1 = arith.constant 0 : i32
    return %c0_i32, %c0_i32_0 : i32, i32
  }
  func.func @transform_2(%arg0: i32) -> (i32, i32) {
    %c0_i32 = arith.constant 0 : i32
    %c0_i32_0 = arith.constant 0 : i32
    %c0_i32_1 = arith.constant 0 : i32
    return %c0_i32, %c0_i32_0 : i32, i32
  }
  func.func @transform_3(%arg0: i32) -> (i32, i32) {
    %c0_i32 = arith.constant 0 : i32
    %c0_i32_0 = arith.constant 0 : i32
    %c0_i32_1 = arith.constant 0 : i32
    return %c0_i32, %c0_i32_0 : i32, i32
  }
  func.func @transform_4(%arg0: i32) -> (i32, i32) {
    %c0_i32 = arith.constant 0 : i32
    %c0_i32_0 = arith.constant 0 : i32
    %c0_i32_1 = arith.constant 0 : i32
    return %c0_i32, %c0_i32_0 : i32, i32
  }
  func.func @transform_5(%arg0: i32) -> (i32, i32) {
    %c0_i32 = arith.constant 0 : i32
    %c0_i32_0 = arith.constant 0 : i32
    %c0_i32_1 = arith.constant 0 : i32
    return %c0_i32, %c0_i32_0 : i32, i32
  }
  func.func @transform_6(%arg0: i32) -> (i32, i32) {
    %c0_i32 = arith.constant 0 : i32
    %c0_i32_0 = arith.constant 0 : i32
    %c0_i32_1 = arith.constant 0 : i32
    return %c0_i32, %c0_i32_0 : i32, i32
  }
  func.func @transform_7(%arg0: i32) -> (i32, i32) {
    %c0_i32 = arith.constant 0 : i32
    %c0_i32_0 = arith.constant 0 : i32
    return %arg0, %c0_i32 : i32, i32
  }
}

</mosaic_0001>

<llo_original>
// kernel: tpu_custom_call.1
$region0: #{tpu_custom_call.1}
  #allocation0 [shape = 'u32[]', space=smem, size = 0x4, offset = 0x4, fixed_abs, tag = 'smem constant byte address 0x4 - core index']
  #allocation1 [shape = 'u32[144,128]{1,0:T(1,128)}', space=vmem, size = 0x12000, scoped, tag = 'internal scratch']
  %s0 = inlined_call_operand.vmem [shape: f32[128,32], index: 0, kind: input, shape index: {}]
  %s1 = inlined_call_operand.hbm [shape: bf16[32,512], index: 1, kind: input, shape index: {}]
  %s2 = inlined_call_operand.vmem [shape: f32[1,512], index: 2, kind: input, shape index: {}]
  %s3 = inlined_call_operand.hbm [shape: bf16[512,256], index: 3, kind: input, shape index: {}]
  %s4 = inlined_call_operand.vmem [shape: f32[1,256], index: 4, kind: input, shape index: {}]
  %s5 = inlined_call_operand.vmem [shape: bf16[256,128], index: 5, kind: input, shape index: {}]
  %s6 = inlined_call_operand.vmem [shape: f32[1,128], index: 6, kind: input, shape index: {}]
  %s7 = inlined_call_operand.hbm [shape: f32[128,128], index: 7, kind: output, shape index: {}]
  %s8 = sld [smem:[#allocation0]]
  $region46: #{tpu_custom_call.1} parent=0
    _
  %s10 = ssub.s32 1, %s8
  %s11 = scalar_select 0, %s10, %s8
  $region1: #{tpu_custom_call.1} parent=0
    #allocation2 [shape = 'u8[32768]{0}', space=vmem, size = 0x8000, scoped, tag = 'input window, operand 1, single buffered']
    #allocation3 [shape = 's32[1]{0}', space=sflag, size = 0x4, scoped, tag = 'scoped memory for tpu_custom_call.1']
    #allocation4 [shape = 's32[1]{0}', space=sflag, size = 0x4, scoped, tag = 'scoped memory for tpu_custom_call.1']
    #allocation5 [shape = 'u8[262144]{0}', space=vmem, size = 0x40000, scoped, tag = 'input window, operand 3, single buffered']
    #allocation6 [shape = 's32[1]{0}', space=sflag, size = 0x4, scoped, tag = 'scoped memory for tpu_custom_call.1']
    #allocation7 [shape = 'u8[65536]{0}', space=vmem, size = 0x10000, scoped, tag = 'output window, operand 0, single buffered']
    %12 = vsyncpa [#allocation3], 0
    %13 = vsyncpa [#allocation6], 0
    %14 = vsyncpa [#allocation4], 0
    // Predicated region
    $region2: #{tpu_custom_call.1} parent=1 // pred_check
      _
    $region3: #{tpu_custom_call.1} parent=1 // pred_check_branch
      %16 = sbr.rel (0) target = $region5
    $region4: #{tpu_custom_call.1} parent=1 // pred_region
      _
    $region5: #{tpu_custom_call.1} parent=1 // pred_fallthru
      _
    // Predicated region
    $region6: #{tpu_custom_call.1} parent=1 // pred_check
      _
    $region7: #{tpu_custom_call.1} parent=1 // pred_check_branch
      %18 = sbr.rel (0) target = $region9
    $region8: #{tpu_custom_call.1} parent=1 // pred_region
      %s20 = ssub.s32 1024, 1024
      %21 = vsyncadd [#allocation3], %s20
      %s22 = sshll.u32 [#allocation2], 4
      %s23 = int_to_ptr.vmem [resolvable:$true] %s22
      %28 = dma.hbm_to_vmem [thread:$0]  %s1, 1024, %s23, [#allocation3], 256, 256, 16
    $region9: #{tpu_custom_call.1} parent=1 // pred_fallthru
      _
    // Predicated region
    $region10: #{tpu_custom_call.1} parent=1 // pred_check
      _
    $region11: #{tpu_custom_call.1} parent=1 // pred_check_branch
      %30 = sbr.rel (0) target = $region13
    $region12: #{tpu_custom_call.1} parent=1 // pred_region
      _
    $region13: #{tpu_custom_call.1} parent=1 // pred_fallthru
      _
    // Predicated region
    $region14: #{tpu_custom_call.1} parent=1 // pred_check
      _
    $region15: #{tpu_custom_call.1} parent=1 // pred_check_branch
      %32 = sbr.rel (0) target = $region17
    $region16: #{tpu_custom_call.1} parent=1 // pred_region
      %s34 = ssub.s32 8192, 8192
      %35 = vsyncadd [#allocation6], %s34
      %s36 = sshll.u32 [#allocation5], 4
      %s37 = int_to_ptr.vmem [resolvable:$true] %s36
      %42 = dma.hbm_to_vmem [thread:$0]  %s3, 8192, %s37, [#allocation6], 128, 128, 8
    $region17: #{tpu_custom_call.1} parent=1 // pred_fallthru
      _
    // Predicated region
    $region18: #{tpu_custom_call.1} parent=1 // pred_check
      _
    $region19: #{tpu_custom_call.1} parent=1 // pred_check_branch
      %44 = sbr.rel (0) target = $region21
    $region20: #{tpu_custom_call.1} parent=1 // pred_region
      _
    $region21: #{tpu_custom_call.1} parent=1 // pred_fallthru
      _
    // Predicated region
    $region22: #{tpu_custom_call.1} parent=1 // pred_check
      _
    $region23: #{tpu_custom_call.1} parent=1 // pred_check_branch
      %46 = sbr.rel (0) target = $region25
    $region24: #{tpu_custom_call.1} parent=1 // pred_region
      _
    $region25: #{tpu_custom_call.1} parent=1 // pred_fallthru
      _
    // Predicated region
    $region26: #{tpu_custom_call.1} parent=1 // pred_check
      _
    $region27: #{tpu_custom_call.1} parent=1 // pred_check_branch
      %48 = sbr.rel (0) target = $region29
    $region28: #{tpu_custom_call.1} parent=1 // pred_region
      _
    $region29: #{tpu_custom_call.1} parent=1 // pred_fallthru
      _
    // Predicated region
    $region30: #{tpu_custom_call.1} parent=1 // pred_check
      _
    $region31: #{tpu_custom_call.1} parent=1 // pred_check_branch
      %50 = sbr.rel (0) target = $region33
    $region32: #{tpu_custom_call.1} parent=1 // pred_region
      %51 = dma.done [#allocation3], 1024
    $region33: #{tpu_custom_call.1} parent=1 // pred_fallthru
      _
    // Predicated region
    $region34: #{tpu_custom_call.1} parent=1 // pred_check
      _
    $region35: #{tpu_custom_call.1} parent=1 // pred_check_branch
      %53 = sbr.rel (0) target = $region37
    $region36: #{tpu_custom_call.1} parent=1 // pred_region
      %54 = dma.done [#allocation6], 8192
    $region37: #{tpu_custom_call.1} parent=1 // pred_fallthru
      _
    %v56 = vld [vmem:[%s0] sm:$0xff]
    %v57 = vld [vmem:[%s0 + $0x8] sm:$0xff]
    %v58 = vld [vmem:[%s0 + $0x10] sm:$0xff]
    %v59 = vld [vmem:[%s0 + $0x18] sm:$0xff]
    %v60 = vld [vmem:[%s0 + $0x20] sm:$0xff]
    %v61 = vld [vmem:[%s0 + $0x28] sm:$0xff]
    %v62 = vld [vmem:[%s0 + $0x30] sm:$0xff]
    %v63 = vld [vmem:[%s0 + $0x38] sm:$0xff]
    %v64 = vld [vmem:[%s0 + $0x40] sm:$0xff]
    %v65 = vld [vmem:[%s0 + $0x48] sm:$0xff]
    %v66 = vld [vmem:[%s0 + $0x50] sm:$0xff]
    %v67 = vld [vmem:[%s0 + $0x58] sm:$0xff]
    %v68 = vld [vmem:[%s0 + $0x60] sm:$0xff]
    %v69 = vld [vmem:[%s0 + $0x68] sm:$0xff]
    %v70 = vld [vmem:[%s0 + $0x70] sm:$0xff]
    %v71 = vld [vmem:[%s0 + $0x78] sm:$0xff]
    %v72 = vpack.c.bf16 %v57, %v56
    %v73 = vpack.c.bf16 %v59, %v58
    %v74 = vpack.c.bf16 %v61, %v60
    %v75 = vpack.c.bf16 %v63, %v62
    %v76 = vpack.c.bf16 %v65, %v64
    %v77 = vpack.c.bf16 %v67, %v66
    %v78 = vpack.c.bf16 %v69, %v68
    %v79 = vpack.c.bf16 %v71, %v70
    %v80 = vld [vmem:[#allocation2] sm:$0xff]
    %v81 = vld [vmem:[#allocation2 + $0x8] sm:$0xff]
    %v82 = vld [vmem:[#allocation2 + $0x10] sm:$0xff]
    %v83 = vld [vmem:[#allocation2 + $0x18] sm:$0xff]
    %v84 = vld [vmem:[#allocation2 + $0x20] sm:$0xff]
    %v85 = vld [vmem:[#allocation2 + $0x28] sm:$0xff]
    %v86 = vld [vmem:[#allocation2 + $0x30] sm:$0xff]
    %v87 = vld [vmem:[#allocation2 + $0x38] sm:$0xff]
    %v88 = vld [vmem:[%s2] sm:$0xf]
    %v90 = vlaneseq
    %v91 = vshrl.u32 %v90, 7
    %v92 = vsub.s32 0, %v91
    %v93 = vrot.slane %v88, %v92
    %v94 = vlaneseq
    %v95 = vshrl.u32 %v94, 7
    %v96 = vsub.s32 1, %v95
    %v97 = vrot.slane %v88, %v96
    %v98 = vlaneseq
    %v99 = vshrl.u32 %v98, 7
    %v100 = vsub.s32 2, %v99
    %v101 = vrot.slane %v88, %v100
    %v102 = vlaneseq
    %v103 = vshrl.u32 %v102, 7
    %v104 = vsub.s32 3, %v103
    %v105 = vrot.slane %v88, %v104
    %v118 = vunpack.c.l.b16 %v80
    %v119 = vunpack.c.h.b16 %v80
    %v120 = vunpack.c.l.b16 %v81
    %v121 = vunpack.c.h.b16 %v81
    %v122 = vunpack.c.l.b16 %v82
    %v123 = vunpack.c.h.b16 %v82
    %v124 = vunpack.c.l.b16 %v83
    %v125 = vunpack.c.h.b16 %v83
    %v126 = vunpack.c.l.b16 %v84
    %v127 = vunpack.c.h.b16 %v84
    %v128 = vunpack.c.l.b16 %v85
    %v129 = vunpack.c.h.b16 %v85
    %v130 = vunpack.c.l.b16 %v86
    %v131 = vunpack.c.h.b16 %v86
    %v132 = vunpack.c.l.b16 %v87
    %v133 = vunpack.c.h.b16 %v87
    %v134 = vpack.c.b16 %v122, %v118
    %v135 = vpack.c.b16 %v123, %v119
    %v136 = vpack.c.b16 %v124, %v120
    %v137 = vpack.c.b16 %v125, %v121
    %v138 = vpack.c.b16 %v130, %v126
    %v139 = vpack.c.b16 %v131, %v127
    %v140 = vpack.c.b16 %v132, %v128
    %v141 = vpack.c.b16 %v133, %v129
    %vm150 = vcmask 261120
    %v152 = vsel %vm150, %v72, 0
    %v155 = vsel %vm150, %v73, 0
    %v158 = vsel %vm150, %v74, 0
    %v161 = vsel %vm150, %v75, 0
    %v164 = vsel %vm150, %v76, 0
    %v167 = vsel %vm150, %v77, 0
    %v170 = vsel %vm150, %v78, 0
    %v173 = vsel %vm150, %v79, 0
    %175 = vmatprep.subr.bf16.mxu0 %v135
    %176 = vmatpush1.bf16.msra.mxu0 %v134
    %177 = vmatprep.subr.bf16.mxu0 %v139
    %178 = vmatpush1.bf16.msra.mxu0 %v138
    %179 = vmatprep.subr.bf16.mxu0 0
    %180 = vmatpush1.bf16.msra.mxu0 0
    %181 = vmatprep.subr.bf16.mxu0 0
    %182 = vmatpush1.bf16.msra.mxu0 0
    %183 = vmatprep.subr.bf16.mxu0 0
    %184 = vmatpush1.bf16.msra.mxu0 0
    %185 = vmatprep.subr.bf16.mxu0 0
    %186 = vmatpush1.bf16.msra.mxu0 0
    %187 = vmatprep.subr.bf16.mxu0 0
    %188 = vmatpush1.bf16.msra.mxu0 0
    %189 = vmatprep.subr.bf16.mxu0 0
    %190 = vmatpush1.bf16.msra.mxu0 0
    %191 = vmatprep.subr.bf16.mxu0 0
    %192 = vmatpush1.bf16.msra.mxu0 0
    %193 = vmatprep.subr.bf16.mxu0 0
    %194 = vmatpush1.bf16.msra.mxu0 0
    %195 = vmatprep.subr.bf16.mxu0 0
    %196 = vmatpush1.bf16.msra.mxu0 0
    %197 = vmatprep.subr.bf16.mxu0 0
    %198 = vmatpush1.bf16.msra.mxu0 0
    %199 = vmatprep.subr.bf16.mxu0 0
    %200 = vmatpush1.bf16.msra.mxu0 0
    %201 = vmatprep.subr.bf16.mxu0 0
    %202 = vmatpush1.bf16.msra.mxu0 0
    %203 = vmatprep.subr.bf16.mxu0 0
    %204 = vmatpush1.bf16.msra.mxu0 0
    %205 = vmatprep.subr.bf16.mxu0 0
    %206 = vmatpush1.bf16.msra.mxu0 0
    %207 = vmatprep.mubr.bf16.mxu0 0
    %208 = vmatmul.mubr.bf16.gmra.mrb[0].mxu0 %v152
    %v209 = vpop.f32.mrb[0].mxu0
    %v210 = vadd.f32 %v93, %v209
    %v211 = vpop.f32.mrb[0].mxu0
    %v212 = vadd.f32 %v97, %v211
    %v213 = vpop.f32.mrb[0].mxu0
    %v214 = vadd.f32 %v93, %v213
    %v215 = vpop.f32.mrb[0].mxu0
    %v216 = vadd.f32 %v97, %v215
    %217 = vmatprep.mubr.bf16.mxu0 0
    %218 = vmatmul.mubr.bf16.gmra.mrb[0].mxu0 %v155
    %v219 = vpop.f32.mrb[0].mxu0
    %v220 = vadd.f32 %v93, %v219
    %v221 = vpop.f32.mrb[0].mxu0
    %v222 = vadd.f32 %v97, %v221
    %v223 = vpop.f32.mrb[0].mxu0
    %v224 = vadd.f32 %v93, %v223
    %v225 = vpop.f32.mrb[0].mxu0
    %v226 = vadd.f32 %v97, %v225
    %227 = vmatprep.mubr.bf16.mxu0 0
    %228 = vmatmul.mubr.bf16.gmra.mrb[0].mxu0 %v158
    %v229 = vpop.f32.mrb[0].mxu0
    %v230 = vadd.f32 %v93, %v229
    %v231 = vpop.f32.mrb[0].mxu0
    %v232 = vadd.f32 %v97, %v231
    %v233 = vpop.f32.mrb[0].mxu0
    %v234 = vadd.f32 %v93, %v233
    %v235 = vpop.f32.mrb[0].mxu0
    %v236 = vadd.f32 %v97, %v235
    %237 = vmatprep.mubr.bf16.mxu0 0
    %238 = vmatmul.mubr.bf16.gmra.mrb[0].mxu0 %v161
    %v239 = vpop.f32.mrb[0].mxu0
    %v240 = vadd.f32 %v93, %v239
    %v241 = vpop.f32.mrb[0].mxu0
    %v242 = vadd.f32 %v97, %v241
    %v243 = vpop.f32.mrb[0].mxu0
    %v244 = vadd.f32 %v93, %v243
    %v245 = vpop.f32.mrb[0].mxu0
    %v246 = vadd.f32 %v97, %v245
    %247 = vmatprep.mubr.bf16.mxu0 0
    %248 = vmatmul.mubr.bf16.gmra.mrb[0].mxu0 %v164
    %v249 = vpop.f32.mrb[0].mxu0
    %v250 = vadd.f32 %v93, %v249
    %v251 = vpop.f32.mrb[0].mxu0
    %v252 = vadd.f32 %v97, %v251
    %v253 = vpop.f32.mrb[0].mxu0
    %v254 = vadd.f32 %v93, %v253
    %v255 = vpop.f32.mrb[0].mxu0
    %v256 = vadd.f32 %v97, %v255
    %257 = vmatprep.mubr.bf16.mxu0 0
    %258 = vmatmul.mubr.bf16.gmra.mrb[0].mxu0 %v167
    %v259 = vpop.f32.mrb[0].mxu0
    %v260 = vadd.f32 %v93, %v259
    %v261 = vpop.f32.mrb[0].mxu0
    %v262 = vadd.f32 %v97, %v261
    %v263 = vpop.f32.mrb[0].mxu0
    %v264 = vadd.f32 %v93, %v263
    %v265 = vpop.f32.mrb[0].mxu0
    %v266 = vadd.f32 %v97, %v265
    %267 = vmatprep.mubr.bf16.mxu0 0
    %268 = vmatmul.mubr.bf16.gmra.mrb[0].mxu0 %v170
    %v269 = vpop.f32.mrb[0].mxu0
    %v270 = vadd.f32 %v93, %v269
    %v271 = vpop.f32.mrb[0].mxu0
    %v272 = vadd.f32 %v97, %v271
    %v273 = vpop.f32.mrb[0].mxu0
    %v274 = vadd.f32 %v93, %v273
    %v275 = vpop.f32.mrb[0].mxu0
    %v276 = vadd.f32 %v97, %v275
    %277 = vmatprep.mubr.bf16.mxu0 0
    %278 = vmatmul.mubr.bf16.gmra.mrb[0].mxu0 %v173
    %v279 = vpop.f32.mrb[0].mxu0
    %v280 = vadd.f32 %v93, %v279
    %v281 = vpop.f32.mrb[0].mxu0
    %v282 = vadd.f32 %v97, %v281
    %v283 = vpop.f32.mrb[0].mxu0
    %v284 = vadd.f32 %v93, %v283
    %v285 = vpop.f32.mrb[0].mxu0
    %v286 = vadd.f32 %v97, %v285
    %287 = vdwg.mxu0
    %288 = vmatprep.subr.bf16.mxu0 %v137
    %289 = vmatpush1.bf16.msra.mxu0 %v136
    %290 = vmatprep.subr.bf16.mxu0 %v141
    %291 = vmatpush1.bf16.msra.mxu0 %v140
    %292 = vmatprep.subr.bf16.mxu0 0
    %293 = vmatpush1.bf16.msra.mxu0 0
    %294 = vmatprep.subr.bf16.mxu0 0
    %295 = vmatpush1.bf16.msra.mxu0 0
    %296 = vmatprep.subr.bf16.mxu0 0
    %297 = vmatpush1.bf16.msra.mxu0 0
    %298 = vmatprep.subr.bf16.mxu0 0
    %299 = vmatpush1.bf16.msra.mxu0 0
    %300 = vmatprep.subr.bf16.mxu0 0
    %301 = vmatpush1.bf16.msra.mxu0 0
    %302 = vmatprep.subr.bf16.mxu0 0
    %303 = vmatpush1.bf16.msra.mxu0 0
    %304 = vmatprep.subr.bf16.mxu0 0
    %305 = vmatpush1.bf16.msra.mxu0 0
    %306 = vmatprep.subr.bf16.mxu0 0
    %307 = vmatpush1.bf16.msra.mxu0 0
    %308 = vmatprep.subr.bf16.mxu0 0
    %309 = vmatpush1.bf16.msra.mxu0 0
    %310 = vmatprep.subr.bf16.mxu0 0
    %311 = vmatpush1.bf16.msra.mxu0 0
    %312 = vmatprep.subr.bf16.mxu0 0
    %313 = vmatpush1.bf16.msra.mxu0 0
    %314 = vmatprep.subr.bf16.mxu0 0
    %315 = vmatpush1.bf16.msra.mxu0 0
    %316 = vmatprep.subr.bf16.mxu0 0
    %317 = vmatpush1.bf16.msra.mxu0 0
    %318 = vmatprep.subr.bf16.mxu0 0
    %319 = vmatpush1.bf16.msra.mxu0 0
    %320 = vmatprep.mubr.bf16.mxu0 0
    %321 = vmatmul.mubr.bf16.gmra.mrb[0].mxu0 %v152
    %v322 = vpop.f32.mrb[0].mxu0
    %v323 = vadd.f32 %v101, %v322
    %v324 = vpop.f32.mrb[0].mxu0
    %v325 = vadd.f32 %v105, %v324
    %v326 = vpop.f32.mrb[0].mxu0
    %v327 = vadd.f32 %v101, %v326
    %v328 = vpop.f32.mrb[0].mxu0
    %v329 = vadd.f32 %v105, %v328
    %330 = vmatprep.mubr.bf16.mxu0 0
    %331 = vmatmul.mubr.bf16.gmra.mrb[0].mxu0 %v155
    %v332 = vpop.f32.mrb[0].mxu0
    %v333 = vadd.f32 %v101, %v332
    %v334 = vpop.f32.mrb[0].mxu0
    %v335 = vadd.f32 %v105, %v334
    %v336 = vpop.f32.mrb[0].mxu0
    %v337 = vadd.f32 %v101, %v336
    %v338 = vpop.f32.mrb[0].mxu0
    %v339 = vadd.f32 %v105, %v338
    %340 = vmatprep.mubr.bf16.mxu0 0
    %341 = vmatmul.mubr.bf16.gmra.mrb[0].mxu0 %v158
    %v342 = vpop.f32.mrb[0].mxu0
    %v343 = vadd.f32 %v101, %v342
    %v344 = vpop.f32.mrb[0].mxu0
    %v345 = vadd.f32 %v105, %v344
    %v346 = vpop.f32.mrb[0].mxu0
    %v347 = vadd.f32 %v101, %v346
    %v348 = vpop.f32.mrb[0].mxu0
    %v349 = vadd.f32 %v105, %v348
    %350 = vmatprep.mubr.bf16.mxu0 0
    %351 = vmatmul.mubr.bf16.gmra.mrb[0].mxu0 %v161
    %v352 = vpop.f32.mrb[0].mxu0
    %v353 = vadd.f32 %v101, %v352
    %v354 = vpop.f32.mrb[0].mxu0
    %v355 = vadd.f32 %v105, %v354
    %v356 = vpop.f32.mrb[0].mxu0
    %v357 = vadd.f32 %v101, %v356
    %v358 = vpop.f32.mrb[0].mxu0
    %v359 = vadd.f32 %v105, %v358
    %360 = vmatprep.mubr.bf16.mxu0 0
    %361 = vmatmul.mubr.bf16.gmra.mrb[0].mxu0 %v164
    %v362 = vpop.f32.mrb[0].mxu0
    %v363 = vadd.f32 %v101, %v362
    %v364 = vpop.f32.mrb[0].mxu0
    %v365 = vadd.f32 %v105, %v364
    %v366 = vpop.f32.mrb[0].mxu0
    %v367 = vadd.f32 %v101, %v366
    %v368 = vpop.f32.mrb[0].mxu0
    %v369 = vadd.f32 %v105, %v368
    %370 = vmatprep.mubr.bf16.mxu0 0
    %371 = vmatmul.mubr.bf16.gmra.mrb[0].mxu0 %v167
    %v372 = vpop.f32.mrb[0].mxu0
    %v373 = vadd.f32 %v101, %v372
    %v374 = vpop.f32.mrb[0].mxu0
    %v375 = vadd.f32 %v105, %v374
    %v376 = vpop.f32.mrb[0].mxu0
    %v377 = vadd.f32 %v101, %v376
    %v378 = vpop.f32.mrb[0].mxu0
    %v379 = vadd.f32 %v105, %v378
    %380 = vmatprep.mubr.bf16.mxu0 0
    %381 = vmatmul.mubr.bf16.gmra.mrb[0].mxu0 %v170
    %v382 = vpop.f32.mrb[0].mxu0
    %v383 = vadd.f32 %v101, %v382
    %v384 = vpop.f32.mrb[0].mxu0
    %v385 = vadd.f32 %v105, %v384
    %v386 = vpop.f32.mrb[0].mxu0
    %v387 = vadd.f32 %v101, %v386
    %v388 = vpop.f32.mrb[0].mxu0
    %v389 = vadd.f32 %v105, %v388
    %390 = vmatprep.mubr.bf16.mxu0 0
    %391 = vmatmul.mubr.bf16.gmra.mrb[0].mxu0 %v173
    %v392 = vpop.f32.mrb[0].mxu0
    %v393 = vadd.f32 %v101, %v392
    %v394 = vpop.f32.mrb[0].mxu0
    %v395 = vadd.f32 %v105, %v394
    %v396 = vpop.f32.mrb[0].mxu0
    %v397 = vadd.f32 %v101, %v396
    %v398 = vpop.f32.mrb[0].mxu0
    %v399 = vadd.f32 %v105, %v398
    %400 = vdwg.mxu0
    %v401 = vmul.f32 %v210, 0.2
    %v402 = vmul.f32 %v212, 0.2
    %v403 = vmul.f32 %v323, 0.2
    %v404 = vmul.f32 %v325, 0.2
    %v405 = vmul.f32 %v214, 0.2
    %v406 = vmul.f32 %v216, 0.2
    %v407 = vmul.f32 %v327, 0.2
    %v408 = vmul.f32 %v329, 0.2
    %v409 = vmul.f32 %v220, 0.2
    %v410 = vmul.f32 %v222, 0.2
    %v411 = vmul.f32 %v333, 0.2
    %v412 = vmul.f32 %v335, 0.2
    %v413 = vmul.f32 %v224, 0.2
    %v414 = vmul.f32 %v226, 0.2
    %v415 = vmul.f32 %v337, 0.2
    %v416 = vmul.f32 %v339, 0.2
    %v417 = vmul.f32 %v230, 0.2
    %v418 = vmul.f32 %v232, 0.2
    %v419 = vmul.f32 %v343, 0.2
    %v420 = vmul.f32 %v345, 0.2
    %v421 = vmul.f32 %v234, 0.2
    %v422 = vmul.f32 %v236, 0.2
    %v423 = vmul.f32 %v347, 0.2
    %v424 = vmul.f32 %v349, 0.2
    %v425 = vmul.f32 %v240, 0.2
    %v426 = vmul.f32 %v242, 0.2
    %v427 = vmul.f32 %v353, 0.2
    %v428 = vmul.f32 %v355, 0.2
    %v429 = vmul.f32 %v244, 0.2
    %v430 = vmul.f32 %v246, 0.2
    %v431 = vmul.f32 %v357, 0.2
    %v432 = vmul.f32 %v359, 0.2
    %v433 = vmul.f32 %v250, 0.2
    %v434 = vmul.f32 %v252, 0.2
    %v435 = vmul.f32 %v363, 0.2
    %v436 = vmul.f32 %v365, 0.2
    %v437 = vmul.f32 %v254, 0.2
    %v438 = vmul.f32 %v256, 0.2
    %v439 = vmul.f32 %v367, 0.2
    %v440 = vmul.f32 %v369, 0.2
    %v441 = vmul.f32 %v260, 0.2
    %v442 = vmul.f32 %v262, 0.2
    %v443 = vmul.f32 %v373, 0.2
    %v444 = vmul.f32 %v375, 0.2
    %v445 = vmul.f32 %v264, 0.2
    %v446 = vmul.f32 %v266, 0.2
    %v447 = vmul.f32 %v377, 0.2
    %v448 = vmul.f32 %v379, 0.2
    %v449 = vmul.f32 %v270, 0.2
    %v450 = vmul.f32 %v272, 0.2
    %v451 = vmul.f32 %v383, 0.2
    %v452 = vmul.f32 %v385, 0.2
    %v453 = vmul.f32 %v274, 0.2
    %v454 = vmul.f32 %v276, 0.2
    %v455 = vmul.f32 %v387, 0.2
    %v456 = vmul.f32 %v389, 0.2
    %v457 = vmul.f32 %v280, 0.2
    %v458 = vmul.f32 %v282, 0.2
    %v459 = vmul.f32 %v393, 0.2
    %v460 = vmul.f32 %v395, 0.2
    %v461 = vmul.f32 %v284, 0.2
    %v462 = vmul.f32 %v286, 0.2
    %v463 = vmul.f32 %v397, 0.2
    %v464 = vmul.f32 %v399, 0.2
    %v465 = vmax.f32 %v210, %v401
    %v466 = vmax.f32 %v212, %v402
    %v467 = vmax.f32 %v323, %v403
    %v468 = vmax.f32 %v325, %v404
    %v469 = vmax.f32 %v214, %v405
    %v470 = vmax.f32 %v216, %v406
    %v471 = vmax.f32 %v327, %v407
    %v472 = vmax.f32 %v329, %v408
    %v473 = vmax.f32 %v220, %v409
    %v474 = vmax.f32 %v222, %v410
    %v475 = vmax.f32 %v333, %v411
    %v476 = vmax.f32 %v335, %v412
    %v477 = vmax.f32 %v224, %v413
    %v478 = vmax.f32 %v226, %v414
    %v479 = vmax.f32 %v337, %v415
    %v480 = vmax.f32 %v339, %v416
    %v481 = vmax.f32 %v230, %v417
    %v482 = vmax.f32 %v232, %v418
    %v483 = vmax.f32 %v343, %v419
    %v484 = vmax.f32 %v345, %v420
    %v485 = vmax.f32 %v234, %v421
    %v486 = vmax.f32 %v236, %v422
    %v487 = vmax.f32 %v347, %v423
    %v488 = vmax.f32 %v349, %v424
    %v489 = vmax.f32 %v240, %v425
    %v490 = vmax.f32 %v242, %v426
    %v491 = vmax.f32 %v353, %v427
    %v492 = vmax.f32 %v355, %v428
    %v493 = vmax.f32 %v244, %v429
    %v494 = vmax.f32 %v246, %v430
    %v495 = vmax.f32 %v357, %v431
    %v496 = vmax.f32 %v359, %v432
    %v497 = vmax.f32 %v250, %v433
    %v498 = vmax.f32 %v252, %v434
    %v499 = vmax.f32 %v363, %v435
    %v500 = vmax.f32 %v365, %v436
    %v501 = vmax.f32 %v254, %v437
    %v502 = vmax.f32 %v256, %v438
    %v503 = vmax.f32 %v367, %v439
    %v504 = vmax.f32 %v369, %v440
    %v505 = vmax.f32 %v260, %v441
    %v506 = vmax.f32 %v262, %v442
    %v507 = vmax.f32 %v373, %v443
    %v508 = vmax.f32 %v375, %v444
    %v509 = vmax.f32 %v264, %v445
    %v510 = vmax.f32 %v266, %v446
    %v511 = vmax.f32 %v377, %v447
    %v512 = vmax.f32 %v379, %v448
    %v513 = vmax.f32 %v270, %v449
    %v514 = vmax.f32 %v272, %v450
    %v515 = vmax.f32 %v383, %v451
    %v516 = vmax.f32 %v385, %v452
    %v517 = vmax.f32 %v274, %v453
    %v518 = vmax.f32 %v276, %v454
    %v519 = vmax.f32 %v387, %v455
    %v520 = vmax.f32 %v389, %v456
    %v521 = vmax.f32 %v280, %v457
    %v522 = vmax.f32 %v282, %v458
    %v523 = vmax.f32 %v393, %v459
    %v524 = vmax.f32 %v395, %v460
    %v525 = vmax.f32 %v284, %v461
    %v526 = vmax.f32 %v286, %v462
    %v527 = vmax.f32 %v397, %v463
    %v528 = vmax.f32 %v399, %v464
    %v529 = vpack.c.bf16 %v469, %v465
    %v530 = vpack.c.bf16 %v470, %v466
    %v531 = vpack.c.bf16 %v471, %v467
    %v532 = vpack.c.bf16 %v472, %v468
    %v533 = vpack.c.bf16 %v477, %v473
    %v534 = vpack.c.bf16 %v478, %v474
    %v535 = vpack.c.bf16 %v479, %v475
    %v536 = vpack.c.bf16 %v480, %v476
    %v537 = vpack.c.bf16 %v485, %v481
    %v538 = vpack.c.bf16 %v486, %v482
    %v539 = vpack.c.bf16 %v487, %v483
    %v540 = vpack.c.bf16 %v488, %v484
    %v541 = vpack.c.bf16 %v493, %v489
    %v542 = vpack.c.bf16 %v494, %v490
    %v543 = vpack.c.bf16 %v495, %v491
    %v544 = vpack.c.bf16 %v496, %v492
    %v545 = vpack.c.bf16 %v501, %v497
    %v546 = vpack.c.bf16 %v502, %v498
    %v547 = vpack.c.bf16 %v503, %v499
    %v548 = vpack.c.bf16 %v504, %v500
    %v549 = vpack.c.bf16 %v509, %v505
    %v550 = vpack.c.bf16 %v510, %v506
    %v551 = vpack.c.bf16 %v511, %v507
    %v552 = vpack.c.bf16 %v512, %v508
    %v553 = vpack.c.bf16 %v517, %v513
    %v554 = vpack.c.bf16 %v518, %v514
    %v555 = vpack.c.bf16 %v519, %v515
    %v556 = vpack.c.bf16 %v520, %v516
    %v557 = vpack.c.bf16 %v525, %v521
    %v558 = vpack.c.bf16 %v526, %v522
    %v559 = vpack.c.bf16 %v527, %v523
    %v560 = vpack.c.bf16 %v528, %v524
    %v561 = vld [vmem:[#allocation5] sm:$0xff]
    %v562 = vld [vmem:[#allocation5 + $0x8] sm:$0xff]
    %v563 = vld [vmem:[#allocation5 + $0x10] sm:$0xff]
    %v564 = vld [vmem:[#allocation5 + $0x18] sm:$0xff]
    %v565 = vld [vmem:[#allocation5 + $0x20] sm:$0xff]
    %v566 = vld [vmem:[#allocation5 + $0x28] sm:$0xff]
    %v567 = vld [vmem:[#allocation5 + $0x30] sm:$0xff]
    %v568 = vld [vmem:[#allocation5 + $0x38] sm:$0xff]
    %v569 = vld [vmem:[#allocation5 + $0x40] sm:$0xff]
    %v570 = vld [vmem:[#allocation5 + $0x48] sm:$0xff]
    %v571 = vld [vmem:[#allocation5 + $0x50] sm:$0xff]
    %v572 = vld [vmem:[#allocation5 + $0x58] sm:$0xff]
    %v573 = vld [vmem:[#allocation5 + $0x60] sm:$0xff]
    %v574 = vld [vmem:[#allocation5 + $0x68] sm:$0xff]
    %v575 = vld [vmem:[#allocation5 + $0x70] sm:$0xff]
    %v576 = vld [vmem:[#allocation5 + $0x78] sm:$0xff]
    %v577 = vld [vmem:[#allocation5 + $0x80] sm:$0xff]
    %v578 = vld [vmem:[#allocation5 + $0x88] sm:$0xff]
    %v579 = vld [vmem:[#allocation5 + $0x90] sm:$0xff]
    %v580 = vld [vmem:[#allocation5 + $0x98] sm:$0xff]
    %v581 = vld [vmem:[#allocation5 + $0xa0] sm:$0xff]
    %v582 = vld [vmem:[#allocation5 + $0xa8] sm:$0xff]
    %v583 = vld [vmem:[#allocation5 + $0xb0] sm:$0xff]
    %v584 = vld [vmem:[#allocation5 + $0xb8] sm:$0xff]
    %v585 = vld [vmem:[#allocation5 + $0xc0] sm:$0xff]
    %v586 = vld [vmem:[#allocation5 + $0xc8] sm:$0xff]
    %v587 = vld [vmem:[#allocation5 + $0xd0] sm:$0xff]
    %v588 = vld [vmem:[#allocation5 + $0xd8] sm:$0xff]
    %v589 = vld [vmem:[#allocation5 + $0xe0] sm:$0xff]
    %v590 = vld [vmem:[#allocation5 + $0xe8] sm:$0xff]
    %v591 = vld [vmem:[#allocation5 + $0xf0] sm:$0xff]
    %v592 = vld [vmem:[#allocation5 + $0xf8] sm:$0xff]
    %v593 = vld [vmem:[#allocation5 + $0x100] sm:$0xff]
    %v594 = vld [vmem:[#allocation5 + $0x108] sm:$0xff]
    %v595 = vld [vmem:[#allocation5 + $0x110] sm:$0xff]
    %v596 = vld [vmem:[#allocation5 + $0x118] sm:$0xff]
    %v597 = vld [vmem:[#allocation5 + $0x120] sm:$0xff]
    %v598 = vld [vmem:[#allocation5 + $0x128] sm:$0xff]
    %v599 = vld [vmem:[#allocation5 + $0x130] sm:$0xff]
    %v600 = vld [vmem:[#allocation5 + $0x138] sm:$0xff]
    %v601 = vld [vmem:[#allocation5 + $0x140] sm:$0xff]
    %v602 = vld [vmem:[#allocation5 + $0x148] sm:$0xff]
    %v603 = vld [vmem:[#allocation5 + $0x150] sm:$0xff]
    %v604 = vld [vmem:[#allocation5 + $0x158] sm:$0xff]
    %v605 = vld [vmem:[#allocation5 + $0x160] sm:$0xff]
    %v606 = vld [vmem:[#allocation5 + $0x168] sm:$0xff]
    %v607 = vld [vmem:[#allocation5 + $0x170] sm:$0xff]
    %v608 = vld [vmem:[#allocation5 + $0x178] sm:$0xff]
    %v609 = vld [vmem:[#allocation5 + $0x180] sm:$0xff]
    %v610 = vld [vmem:[#allocation5 + $0x188] sm:$0xff]
    %v611 = vld [vmem:[#allocation5 + $0x190] sm:$0xff]
    %v612 = vld [vmem:[#allocation5 + $0x198] sm:$0xff]
    %v613 = vld [vmem:[#allocation5 + $0x1a0] sm:$0xff]
    %v614 = vld [vmem:[#allocation5 + $0x1a8] sm:$0xff]
    %v615 = vld [vmem:[#allocation5 + $0x1b0] sm:$0xff]
    %v616 = vld [vmem:[#allocation5 + $0x1b8] sm:$0xff]
    %v617 = vld [vmem:[#allocation5 + $0x1c0] sm:$0xff]
    %v618 = vld [vmem:[#allocation5 + $0x1c8] sm:$0xff]
    %v619 = vld [vmem:[#allocation5 + $0x1d0] sm:$0xff]
    %v620 = vld [vmem:[#allocation5 + $0x1d8] sm:$0xff]
    %v621 = vld [vmem:[#allocation5 + $0x1e0] sm:$0xff]
    %v622 = vld [vmem:[#allocation5 + $0x1e8] sm:$0xff]
    %v623 = vld [vmem:[#allocation5 + $0x1f0] sm:$0xff]
    %v624 = vld [vmem:[#allocation5 + $0x1f8] sm:$0xff]
    %v625 = vld [vmem:[%s4] sm:$0x3]
    %v627 = vlaneseq
    %v628 = vshrl.u32 %v627, 7
    %v629 = vsub.s32 0, %v628
    %v630 = vrot.slane %v625, %v629
    %v631 = vlaneseq
    %v632 = vshrl.u32 %v631, 7
    %v633 = vsub.s32 1, %v632
    %v634 = vrot.slane %v625, %v633
    %v701 = vunpack.c.l.b16 %v561
    %v702 = vunpack.c.h.b16 %v561
    %v703 = vunpack.c.l.b16 %v562
    %v704 = vunpack.c.h.b16 %v562
    %v705 = vunpack.c.l.b16 %v563
    %v706 = vunpack.c.h.b16 %v563
    %v707 = vunpack.c.l.b16 %v564
    %v708 = vunpack.c.h.b16 %v564
    %v709 = vunpack.c.l.b16 %v565
    %v710 = vunpack.c.h.b16 %v565
    %v711 = vunpack.c.l.b16 %v566
    %v712 = vunpack.c.h.b16 %v566
    %v713 = vunpack.c.l.b16 %v567
    %v714 = vunpack.c.h.b16 %v567
    %v715 = vunpack.c.l.b16 %v568
    %v716 = vunpack.c.h.b16 %v568
    %v717 = vunpack.c.l.b16 %v569
    %v718 = vunpack.c.h.b16 %v569
    %v719 = vunpack.c.l.b16 %v570
    %v720 = vunpack.c.h.b16 %v570
    %v721 = vunpack.c.l.b16 %v571
    %v722 = vunpack.c.h.b16 %v571
    %v723 = vunpack.c.l.b16 %v572
    %v724 = vunpack.c.h.b16 %v572
    %v725 = vunpack.c.l.b16 %v573
    %v726 = vunpack.c.h.b16 %v573
    %v727 = vunpack.c.l.b16 %v574
    %v728 = vunpack.c.h.b16 %v574
    %v729 = vunpack.c.l.b16 %v575
    %v730 = vunpack.c.h.b16 %v575
    %v731 = vunpack.c.l.b16 %v576
    %v732 = vunpack.c.h.b16 %v576
    %v733 = vunpack.c.l.b16 %v577
    %v734 = vunpack.c.h.b16 %v577
    %v735 = vunpack.c.l.b16 %v578
    %v736 = vunpack.c.h.b16 %v578
    %v737 = vunpack.c.l.b16 %v579
    %v738 = vunpack.c.h.b16 %v579
    %v739 = vunpack.c.l.b16 %v580
    %v740 = vunpack.c.h.b16 %v580
    %v741 = vunpack.c.l.b16 %v581
    %v742 = vunpack.c.h.b16 %v581
    %v743 = vunpack.c.l.b16 %v582
    %v744 = vunpack.c.h.b16 %v582
    %v745 = vunpack.c.l.b16 %v583
    %v746 = vunpack.c.h.b16 %v583
    %v747 = vunpack.c.l.b16 %v584
    %v748 = vunpack.c.h.b16 %v584
    %v749 = vunpack.c.l.b16 %v585
    %v750 = vunpack.c.h.b16 %v585
    %v751 = vunpack.c.l.b16 %v586
    %v752 = vunpack.c.h.b16 %v586
    %v753 = vunpack.c.l.b16 %v587
    %v754 = vunpack.c.h.b16 %v587
    %v755 = vunpack.c.l.b16 %v588
    %v756 = vunpack.c.h.b16 %v588
    %v757 = vunpack.c.l.b16 %v589
    %v758 = vunpack.c.h.b16 %v589
    %v759 = vunpack.c.l.b16 %v590
    %v760 = vunpack.c.h.b16 %v590
    %v761 = vunpack.c.l.b16 %v591
    %v762 = vunpack.c.h.b16 %v591
    %v763 = vunpack.c.l.b16 %v592
    %v764 = vunpack.c.h.b16 %v592
    %v765 = vunpack.c.l.b16 %v593
    %v766 = vunpack.c.h.b16 %v593
    %v767 = vunpack.c.l.b16 %v594
    %v768 = vunpack.c.h.b16 %v594
    %v769 = vunpack.c.l.b16 %v595
    %v770 = vunpack.c.h.b16 %v595
    %v771 = vunpack.c.l.b16 %v596
    %v772 = vunpack.c.h.b16 %v596
    %v773 = vunpack.c.l.b16 %v597
    %v774 = vunpack.c.h.b16 %v597
    %v775 = vunpack.c.l.b16 %v598
    %v776 = vunpack.c.h.b16 %v598
    %v777 = vunpack.c.l.b16 %v599
    %v778 = vunpack.c.h.b16 %v599
    %v779 = vunpack.c.l.b16 %v600
    %v780 = vunpack.c.h.b16 %v600
    %v781 = vunpack.c.l.b16 %v601
    %v782 = vunpack.c.h.b16 %v601
    %v783 = vunpack.c.l.b16 %v602
    %v784 = vunpack.c.h.b16 %v602
    %v785 = vunpack.c.l.b16 %v603
    %v786 = vunpack.c.h.b16 %v603
    %v787 = vunpack.c.l.b16 %v604
    %v788 = vunpack.c.h.b16 %v604
    %v789 = vunpack.c.l.b16 %v605
    %v790 = vunpack.c.h.b16 %v605
    %v791 = vunpack.c.l.b16 %v606
    %v792 = vunpack.c.h.b16 %v606
    %v793 = vunpack.c.l.b16 %v607
    %v794 = vunpack.c.h.b16 %v607
    %v795 = vunpack.c.l.b16 %v608
    %v796 = vunpack.c.h.b16 %v608
    %v797 = vunpack.c.l.b16 %v609
    %v798 = vunpack.c.h.b16 %v609
    %v799 = vunpack.c.l.b16 %v610
    %v800 = vunpack.c.h.b16 %v610
    %v801 = vunpack.c.l.b16 %v611
    %v802 = vunpack.c.h.b16 %v611
    %v803 = vunpack.c.l.b16 %v612
    %v804 = vunpack.c.h.b16 %v612
    %v805 = vunpack.c.l.b16 %v613
    %v806 = vunpack.c.h.b16 %v613
    %v807 = vunpack.c.l.b16 %v614
    %v808 = vunpack.c.h.b16 %v614
    %v809 = vunpack.c.l.b16 %v615
    %v810 = vunpack.c.h.b16 %v615
    %v811 = vunpack.c.l.b16 %v616
    %v812 = vunpack.c.h.b16 %v616
    %v813 = vunpack.c.l.b16 %v617
    %v814 = vunpack.c.h.b16 %v617
    %v815 = vunpack.c.l.b16 %v618
    %v816 = vunpack.c.h.b16 %v618
    %v817 = vunpack.c.l.b16 %v619
    %v818 = vunpack.c.h.b16 %v619
    %v819 = vunpack.c.l.b16 %v620
    %v820 = vunpack.c.h.b16 %v620
    %v821 = vunpack.c.l.b16 %v621
    %v822 = vunpack.c.h.b16 %v621
    %v823 = vunpack.c.l.b16 %v622
    %v824 = vunpack.c.h.b16 %v622
    %v825 = vunpack.c.l.b16 %v623
    %v826 = vunpack.c.h.b16 %v623
    %v827 = vunpack.c.l.b16 %v624
    %v828 = vunpack.c.h.b16 %v624
    %v829 = vpack.c.b16 %v703, %v701
    %v830 = vpack.c.b16 %v704, %v702
    %v831 = vpack.c.b16 %v707, %v705
    %v832 = vpack.c.b16 %v708, %v706
    %v833 = vpack.c.b16 %v711, %v709
    %v834 = vpack.c.b16 %v712, %v710
    %v835 = vpack.c.b16 %v715, %v713
    %v836 = vpack.c.b16 %v716, %v714
    %v837 = vpack.c.b16 %v719, %v717
    %v838 = vpack.c.b16 %v720, %v718
    %v839 = vpack.c.b16 %v723, %v721
    %v840 = vpack.c.b16 %v724, %v722
    %v841 = vpack.c.b16 %v727, %v725
    %v842 = vpack.c.b16 %v728, %v726
    %v843 = vpack.c.b16 %v731, %v729
    %v844 = vpack.c.b16 %v732, %v730
    %v845 = vpack.c.b16 %v735, %v733
    %v846 = vpack.c.b16 %v736, %v734
    %v847 = vpack.c.b16 %v739, %v737
    %v848 = vpack.c.b16 %v740, %v738
    %v849 = vpack.c.b16 %v743, %v741
    %v850 = vpack.c.b16 %v744, %v742
    %v851 = vpack.c.b16 %v747, %v745
    %v852 = vpack.c.b16 %v748, %v746
    %v853 = vpack.c.b16 %v751, %v749
    %v854 = vpack.c.b16 %v752, %v750
    %v855 = vpack.c.b16 %v755, %v753
    %v856 = vpack.c.b16 %v756, %v754
    %v857 = vpack.c.b16 %v759, %v757
    %v858 = vpack.c.b16 %v760, %v758
    %v859 = vpack.c.b16 %v763, %v761
    %v860 = vpack.c.b16 %v764, %v762
    %v861 = vpack.c.b16 %v767, %v765
    %v862 = vpack.c.b16 %v768, %v766
    %v863 = vpack.c.b16 %v771, %v769
    %v864 = vpack.c.b16 %v772, %v770
    %v865 = vpack.c.b16 %v775, %v773
    %v866 = vpack.c.b16 %v776, %v774
    %v867 = vpack.c.b16 %v779, %v777
    %v868 = vpack.c.b16 %v780, %v778
    %v869 = vpack.c.b16 %v783, %v781
    %v870 = vpack.c.b16 %v784, %v782
    %v871 = vpack.c.b16 %v787, %v785
    %v872 = vpack.c.b16 %v788, %v786
    %v873 = vpack.c.b16 %v791, %v789
    %v874 = vpack.c.b16 %v792, %v790
    %v875 = vpack.c.b16 %v795, %v793
    %v876 = vpack.c.b16 %v796, %v794
    %v877 = vpack.c.b16 %v799, %v797
    %v878 = vpack.c.b16 %v800, %v798
    %v879 = vpack.c.b16 %v803, %v801
    %v880 = vpack.c.b16 %v804, %v802
    %v881 = vpack.c.b16 %v807, %v805
    %v882 = vpack.c.b16 %v808, %v806
    %v883 = vpack.c.b16 %v811, %v809
    %v884 = vpack.c.b16 %v812, %v810
    %v885 = vpack.c.b16 %v815, %v813
    %v886 = vpack.c.b16 %v816, %v814
    %v887 = vpack.c.b16 %v819, %v817
    %v888 = vpack.c.b16 %v820, %v818
    %v889 = vpack.c.b16 %v823, %v821
    %v890 = vpack.c.b16 %v824, %v822
    %v891 = vpack.c.b16 %v827, %v825
    %v892 = vpack.c.b16 %v828, %v826
    %957 = vmatprep.subr.bf16.mxu0 %v830
    %958 = vmatpush1.bf16.msra.mxu0 %v829
    %959 = vmatprep.subr.bf16.mxu0 %v832
    %960 = vmatpush1.bf16.msra.mxu0 %v831
    %961 = vmatprep.subr.bf16.mxu0 %v834
    %962 = vmatpush1.bf16.msra.mxu0 %v833
    %963 = vmatprep.subr.bf16.mxu0 %v836
    %964 = vmatpush1.bf16.msra.mxu0 %v835
    %965 = vmatprep.subr.bf16.mxu0 %v838
    %966 = vmatpush1.bf16.msra.mxu0 %v837
    %967 = vmatprep.subr.bf16.mxu0 %v840
    %968 = vmatpush1.bf16.msra.mxu0 %v839
    %969 = vmatprep.subr.bf16.mxu0 %v842
    %970 = vmatpush1.bf16.msra.mxu0 %v841
    %971 = vmatprep.subr.bf16.mxu0 %v844
    %972 = vmatpush1.bf16.msra.mxu0 %v843
    %973 = vmatprep.subr.bf16.mxu0 %v846
    %974 = vmatpush1.bf16.msra.mxu0 %v845
    %975 = vmatprep.subr.bf16.mxu0 %v848
    %976 = vmatpush1.bf16.msra.mxu0 %v847
    %977 = vmatprep.subr.bf16.mxu0 %v850
    %978 = vmatpush1.bf16.msra.mxu0 %v849
    %979 = vmatprep.subr.bf16.mxu0 %v852
    %980 = vmatpush1.bf16.msra.mxu0 %v851
    %981 = vmatprep.subr.bf16.mxu0 %v854
    %982 = vmatpush1.bf16.msra.mxu0 %v853
    %983 = vmatprep.subr.bf16.mxu0 %v856
    %984 = vmatpush1.bf16.msra.mxu0 %v855
    %985 = vmatprep.subr.bf16.mxu0 %v858
    %986 = vmatpush1.bf16.msra.mxu0 %v857
    %987 = vmatprep.subr.bf16.mxu0 %v860
    %988 = vmatpush1.bf16.msra.mxu0 %v859
    %989 = vmatprep.mubr.bf16.mxu0 %v530
    %990 = vmatmul.mubr.bf16.gmra.mrb[0].mxu0 %v529
    %v991 = vpop.f32.mrb[0].mxu0
    %v992 = vadd.f32 %v630, %v991
    %v993 = vpop.f32.mrb[0].mxu0
    %v994 = vadd.f32 %v634, %v993
    %v995 = vpop.f32.mrb[0].mxu0
    %v996 = vadd.f32 %v630, %v995
    %v997 = vpop.f32.mrb[0].mxu0
    %v998 = vadd.f32 %v634, %v997
    %999 = vmatprep.mubr.bf16.mxu0 %v534
    %1000 = vmatmul.mubr.bf16.gmra.mrb[0].mxu0 %v533
    %v1001 = vpop.f32.mrb[0].mxu0
    %v1002 = vadd.f32 %v630, %v1001
    %v1003 = vpop.f32.mrb[0].mxu0
    %v1004 = vadd.f32 %v634, %v1003
    %v1005 = vpop.f32.mrb[0].mxu0
    %v1006 = vadd.f32 %v630, %v1005
    %v1007 = vpop.f32.mrb[0].mxu0
    %v1008 = vadd.f32 %v634, %v1007
    %1009 = vmatprep.mubr.bf16.mxu0 %v538
    %1010 = vmatmul.mubr.bf16.gmra.mrb[0].mxu0 %v537
    %v1011 = vpop.f32.mrb[0].mxu0
    %v1012 = vadd.f32 %v630, %v1011
    %v1013 = vpop.f32.mrb[0].mxu0
    %v1014 = vadd.f32 %v634, %v1013
    %v1015 = vpop.f32.mrb[0].mxu0
    %v1016 = vadd.f32 %v630, %v1015
    %v1017 = vpop.f32.mrb[0].mxu0
    %v1018 = vadd.f32 %v634, %v1017
    %1019 = vmatprep.mubr.bf16.mxu0 %v542
    %1020 = vmatmul.mubr.bf16.gmra.mrb[0].mxu0 %v541
    %v1021 = vpop.f32.mrb[0].mxu0
    %v1022 = vadd.f32 %v630, %v1021
    %v1023 = vpop.f32.mrb[0].mxu0
    %v1024 = vadd.f32 %v634, %v1023
    %v1025 = vpop.f32.mrb[0].mxu0
    %v1026 = vadd.f32 %v630, %v1025
    %v1027 = vpop.f32.mrb[0].mxu0
    %v1028 = vadd.f32 %v634, %v1027
    %1029 = vmatprep.mubr.bf16.mxu0 %v546
    %1030 = vmatmul.mubr.bf16.gmra.mrb[0].mxu0 %v545
    %v1031 = vpop.f32.mrb[0].mxu0
    %v1032 = vadd.f32 %v630, %v1031
    %v1033 = vpop.f32.mrb[0].mxu0
    %v1034 = vadd.f32 %v634, %v1033
    %v1035 = vpop.f32.mrb[0].mxu0
    %v1036 = vadd.f32 %v630, %v1035
    %v1037 = vpop.f32.mrb[0].mxu0
    %v1038 = vadd.f32 %v634, %v1037
    %1039 = vmatprep.mubr.bf16.mxu0 %v550
    %1040 = vmatmul.mubr.bf16.gmra.mrb[0].mxu0 %v549
    %v1041 = vpop.f32.mrb[0].mxu0
    %v1042 = vadd.f32 %v630, %v1041
    %v1043 = vpop.f32.mrb[0].mxu0
    %v1044 = vadd.f32 %v634, %v1043
    %v1045 = vpop.f32.mrb[0].mxu0
    %v1046 = vadd.f32 %v630, %v1045
    %v1047 = vpop.f32.mrb[0].mxu0
    %v1048 = vadd.f32 %v634, %v1047
    %1049 = vmatprep.mubr.bf16.mxu0 %v554
    %1050 = vmatmul.mubr.bf16.gmra.mrb[0].mxu0 %v553
    %v1051 = vpop.f32.mrb[0].mxu0
    %v1052 = vadd.f32 %v630, %v1051
    %v1053 = vpop.f32.mrb[0].mxu0
    %v1054 = vadd.f32 %v634, %v1053
    %v1055 = vpop.f32.mrb[0].mxu0
    %v1056 = vadd.f32 %v630, %v1055
    %v1057 = vpop.f32.mrb[0].mxu0
    %v1058 = vadd.f32 %v634, %v1057
    %1059 = vmatprep.mubr.bf16.mxu0 %v558
    %1060 = vmatmul.mubr.bf16.gmra.mrb[0].mxu0 %v557
    %v1061 = vpop.f32.mrb[0].mxu0
    %v1062 = vadd.f32 %v630, %v1061
    %v1063 = vpop.f32.mrb[0].mxu0
    %v1064 = vadd.f32 %v634, %v1063
    %v1065 = vpop.f32.mrb[0].mxu0
    %v1066 = vadd.f32 %v630, %v1065
    %v1067 = vpop.f32.mrb[0].mxu0
    %v1068 = vadd.f32 %v634, %v1067
    %1069 = vdwg.mxu0
    %1070 = vmatprep.subr.bf16.mxu0 %v862
    %1071 = vmatpush1.bf16.msra.mxu0 %v861
    %1072 = vmatprep.subr.bf16.mxu0 %v864
    %1073 = vmatpush1.bf16.msra.mxu0 %v863
    %1074 = vmatprep.subr.bf16.mxu0 %v866
    %1075 = vmatpush1.bf16.msra.mxu0 %v865
    %1076 = vmatprep.subr.bf16.mxu0 %v868
    %1077 = vmatpush1.bf16.msra.mxu0 %v867
    %1078 = vmatprep.subr.bf16.mxu0 %v870
    %1079 = vmatpush1.bf16.msra.mxu0 %v869
    %1080 = vmatprep.subr.bf16.mxu0 %v872
    %1081 = vmatpush1.bf16.msra.mxu0 %v871
    %1082 = vmatprep.subr.bf16.mxu0 %v874
    %1083 = vmatpush1.bf16.msra.mxu0 %v873
    %1084 = vmatprep.subr.bf16.mxu0 %v876
    %1085 = vmatpush1.bf16.msra.mxu0 %v875
    %1086 = vmatprep.subr.bf16.mxu0 %v878
    %1087 = vmatpush1.bf16.msra.mxu0 %v877
    %1088 = vmatprep.subr.bf16.mxu0 %v880
    %1089 = vmatpush1.bf16.msra.mxu0 %v879
    %1090 = vmatprep.subr.bf16.mxu0 %v882
    %1091 = vmatpush1.bf16.msra.mxu0 %v881
    %1092 = vmatprep.subr.bf16.mxu0 %v884
    %1093 = vmatpush1.bf16.msra.mxu0 %v883
    %1094 = vmatprep.subr.bf16.mxu0 %v886
    %1095 = vmatpush1.bf16.msra.mxu0 %v885
    %1096 = vmatprep.subr.bf16.mxu0 %v888
    %1097 = vmatpush1.bf16.msra.mxu0 %v887
    %1098 = vmatprep.subr.bf16.mxu0 %v890
    %1099 = vmatpush1.bf16.msra.mxu0 %v889
    %1100 = vmatprep.subr.bf16.mxu0 %v892
    %1101 = vmatpush1.bf16.msra.mxu0 %v891
    %1102 = vmatprep.mubr.bf16.mxu0 %v532
    %1103 = vmatmul.mubr.bf16.gmra.mrb[0].mxu0 %v531
    %v1104 = vpop.f32.mrb[0].mxu0
    %v1105 = vadd.f32 %v992, %v1104
    %v1106 = vpop.f32.mrb[0].mxu0
    %v1107 = vadd.f32 %v994, %v1106
    %v1108 = vpop.f32.mrb[0].mxu0
    %v1109 = vadd.f32 %v996, %v1108
    %v1110 = vpop.f32.mrb[0].mxu0
    %v1111 = vadd.f32 %v998, %v1110
    %1112 = vmatprep.mubr.bf16.mxu0 %v536
    %1113 = vmatmul.mubr.bf16.gmra.mrb[0].mxu0 %v535
    %v1114 = vpop.f32.mrb[0].mxu0
    %v1115 = vadd.f32 %v1002, %v1114
    %v1116 = vpop.f32.mrb[0].mxu0
    %v1117 = vadd.f32 %v1004, %v1116
    %v1118 = vpop.f32.mrb[0].mxu0
    %v1119 = vadd.f32 %v1006, %v1118
    %v1120 = vpop.f32.mrb[0].mxu0
    %v1121 = vadd.f32 %v1008, %v1120
    %1122 = vmatprep.mubr.bf16.mxu0 %v540
    %1123 = vmatmul.mubr.bf16.gmra.mrb[0].mxu0 %v539
    %v1124 = vpop.f32.mrb[0].mxu0
    %v1125 = vadd.f32 %v1012, %v1124
    %v1126 = vpop.f32.mrb[0].mxu0
    %v1127 = vadd.f32 %v1014, %v1126
    %v1128 = vpop.f32.mrb[0].mxu0
    %v1129 = vadd.f32 %v1016, %v1128
    %v1130 = vpop.f32.mrb[0].mxu0
    %v1131 = vadd.f32 %v1018, %v1130
    %1132 = vmatprep.mubr.bf16.mxu0 %v544
    %1133 = vmatmul.mubr.bf16.gmra.mrb[0].mxu0 %v543
    %v1134 = vpop.f32.mrb[0].mxu0
    %v1135 = vadd.f32 %v1022, %v1134
    %v1136 = vpop.f32.mrb[0].mxu0
    %v1137 = vadd.f32 %v1024, %v1136
    %v1138 = vpop.f32.mrb[0].mxu0
    %v1139 = vadd.f32 %v1026, %v1138
    %v1140 = vpop.f32.mrb[0].mxu0
    %v1141 = vadd.f32 %v1028, %v1140
    %1142 = vmatprep.mubr.bf16.mxu0 %v548
    %1143 = vmatmul.mubr.bf16.gmra.mrb[0].mxu0 %v547
    %v1144 = vpop.f32.mrb[0].mxu0
    %v1145 = vadd.f32 %v1032, %v1144
    %v1146 = vpop.f32.mrb[0].mxu0
    %v1147 = vadd.f32 %v1034, %v1146
    %v1148 = vpop.f32.mrb[0].mxu0
    %v1149 = vadd.f32 %v1036, %v1148
    %v1150 = vpop.f32.mrb[0].mxu0
    %v1151 = vadd.f32 %v1038, %v1150
    %1152 = vmatprep.mubr.bf16.mxu0 %v552
    %1153 = vmatmul.mubr.bf16.gmra.mrb[0].mxu0 %v551
    %v1154 = vpop.f32.mrb[0].mxu0
    %v1155 = vadd.f32 %v1042, %v1154
    %v1156 = vpop.f32.mrb[0].mxu0
    %v1157 = vadd.f32 %v1044, %v1156
    %v1158 = vpop.f32.mrb[0].mxu0
    %v1159 = vadd.f32 %v1046, %v1158
    %v1160 = vpop.f32.mrb[0].mxu0
    %v1161 = vadd.f32 %v1048, %v1160
    %1162 = vmatprep.mubr.bf16.mxu0 %v556
    %1163 = vmatmul.mubr.bf16.gmra.mrb[0].mxu0 %v555
    %v1164 = vpop.f32.mrb[0].mxu0
    %v1165 = vadd.f32 %v1052, %v1164
    %v1166 = vpop.f32.mrb[0].mxu0
    %v1167 = vadd.f32 %v1054, %v1166
    %v1168 = vpop.f32.mrb[0].mxu0
    %v1169 = vadd.f32 %v1056, %v1168
    %v1170 = vpop.f32.mrb[0].mxu0
    %v1171 = vadd.f32 %v1058, %v1170
    %1172 = vmatprep.mubr.bf16.mxu0 %v560
    %1173 = vmatmul.mubr.bf16.gmra.mrb[0].mxu0 %v559
    %v1174 = vpop.f32.mrb[0].mxu0
    %v1175 = vadd.f32 %v1062, %v1174
    %v1176 = vpop.f32.mrb[0].mxu0
    %v1177 = vadd.f32 %v1064, %v1176
    %v1178 = vpop.f32.mrb[0].mxu0
    %v1179 = vadd.f32 %v1066, %v1178
    %v1180 = vpop.f32.mrb[0].mxu0
    %v1181 = vadd.f32 %v1068, %v1180
    %1182 = vdwg.mxu0
    %v1183 = vmul.f32 %v1105, 0.2
    %v1184 = vmul.f32 %v1107, 0.2
    %v1185 = vmul.f32 %v1109, 0.2
    %v1186 = vmul.f32 %v1111, 0.2
    %v1187 = vmul.f32 %v1115, 0.2
    %v1188 = vmul.f32 %v1117, 0.2
    %v1189 = vmul.f32 %v1119, 0.2
    %v1190 = vmul.f32 %v1121, 0.2
    %v1191 = vmul.f32 %v1125, 0.2
    %v1192 = vmul.f32 %v1127, 0.2
    %v1193 = vmul.f32 %v1129, 0.2
    %v1194 = vmul.f32 %v1131, 0.2
    %v1195 = vmul.f32 %v1135, 0.2
    %v1196 = vmul.f32 %v1137, 0.2
    %v1197 = vmul.f32 %v1139, 0.2
    %v1198 = vmul.f32 %v1141, 0.2
    %v1199 = vmul.f32 %v1145, 0.2
    %v1200 = vmul.f32 %v1147, 0.2
    %v1201 = vmul.f32 %v1149, 0.2
    %v1202 = vmul.f32 %v1151, 0.2
    %v1203 = vmul.f32 %v1155, 0.2
    %v1204 = vmul.f32 %v1157, 0.2
    %v1205 = vmul.f32 %v1159, 0.2
    %v1206 = vmul.f32 %v1161, 0.2
    %v1207 = vmul.f32 %v1165, 0.2
    %v1208 = vmul.f32 %v1167, 0.2
    %v1209 = vmul.f32 %v1169, 0.2
    %v1210 = vmul.f32 %v1171, 0.2
    %v1211 = vmul.f32 %v1175, 0.2
    %v1212 = vmul.f32 %v1177, 0.2
    %v1213 = vmul.f32 %v1179, 0.2
    %v1214 = vmul.f32 %v1181, 0.2
    %v1215 = vmax.f32 %v1105, %v1183
    %v1216 = vmax.f32 %v1107, %v1184
    %v1217 = vmax.f32 %v1109, %v1185
    %v1218 = vmax.f32 %v1111, %v1186
    %v1219 = vmax.f32 %v1115, %v1187
    %v1220 = vmax.f32 %v1117, %v1188
    %v1221 = vmax.f32 %v1119, %v1189
    %v1222 = vmax.f32 %v1121, %v1190
    %v1223 = vmax.f32 %v1125, %v1191
    %v1224 = vmax.f32 %v1127, %v1192
    %v1225 = vmax.f32 %v1129, %v1193
    %v1226 = vmax.f32 %v1131, %v1194
    %v1227 = vmax.f32 %v1135, %v1195
    %v1228 = vmax.f32 %v1137, %v1196
    %v1229 = vmax.f32 %v1139, %v1197
    %v1230 = vmax.f32 %v1141, %v1198
    %v1231 = vmax.f32 %v1145, %v1199
    %v1232 = vmax.f32 %v1147, %v1200
    %v1233 = vmax.f32 %v1149, %v1201
    %v1234 = vmax.f32 %v1151, %v1202
    %v1235 = vmax.f32 %v1155, %v1203
    %v1236 = vmax.f32 %v1157, %v1204
    %v1237 = vmax.f32 %v1159, %v1205
    %v1238 = vmax.f32 %v1161, %v1206
    %v1239 = vmax.f32 %v1165, %v1207
    %v1240 = vmax.f32 %v1167, %v1208
    %v1241 = vmax.f32 %v1169, %v1209
    %v1242 = vmax.f32 %v1171, %v1210
    %v1243 = vmax.f32 %v1175, %v1211
    %v1244 = vmax.f32 %v1177, %v1212
    %v1245 = vmax.f32 %v1179, %v1213
    %v1246 = vmax.f32 %v1181, %v1214
    %v1247 = vpack.c.bf16 %v1217, %v1215
    %v1248 = vpack.c.bf16 %v1218, %v1216
    %v1249 = vpack.c.bf16 %v1221, %v1219
    %v1250 = vpack.c.bf16 %v1222, %v1220
    %v1251 = vpack.c.bf16 %v1225, %v1223
    %v1252 = vpack.c.bf16 %v1226, %v1224
    %v1253 = vpack.c.bf16 %v1229, %v1227
    %v1254 = vpack.c.bf16 %v1230, %v1228
    %v1255 = vpack.c.bf16 %v1233, %v1231
    %v1256 = vpack.c.bf16 %v1234, %v1232
    %v1257 = vpack.c.bf16 %v1237, %v1235
    %v1258 = vpack.c.bf16 %v1238, %v1236
    %v1259 = vpack.c.bf16 %v1241, %v1239
    %v1260 = vpack.c.bf16 %v1242, %v1240
    %v1261 = vpack.c.bf16 %v1245, %v1243
    %v1262 = vpack.c.bf16 %v1246, %v1244
    %v1263 = vld [vmem:[%s5] sm:$0xf]
    %v1264 = vld [vmem:[%s5 + $0x4] sm:$0xf]
    %v1265 = vld [vmem:[%s5 + $0x8] sm:$0xf]
    %v1266 = vld [vmem:[%s5 + $0xc] sm:$0xf]
    %v1267 = vld [vmem:[%s5 + $0x10] sm:$0xf]
    %v1268 = vld [vmem:[%s5 + $0x14] sm:$0xf]
    %v1269 = vld [vmem:[%s5 + $0x18] sm:$0xf]
    %v1270 = vld [vmem:[%s5 + $0x1c] sm:$0xf]
    %v1271 = vld [vmem:[%s5 + $0x20] sm:$0xf]
    %v1272 = vld [vmem:[%s5 + $0x24] sm:$0xf]
    %v1273 = vld [vmem:[%s5 + $0x28] sm:$0xf]
    %v1274 = vld [vmem:[%s5 + $0x2c] sm:$0xf]
    %v1275 = vld [vmem:[%s5 + $0x30] sm:$0xf]
    %v1276 = vld [vmem:[%s5 + $0x34] sm:$0xf]
    %v1277 = vld [vmem:[%s5 + $0x38] sm:$0xf]
    %v1278 = vld [vmem:[%s5 + $0x3c] sm:$0xf]
    %v1279 = vld [vmem:[%s5 + $0x40] sm:$0xf]
    %v1280 = vld [vmem:[%s5 + $0x44] sm:$0xf]
    %v1281 = vld [vmem:[%s5 + $0x48] sm:$0xf]
    %v1282 = vld [vmem:[%s5 + $0x4c] sm:$0xf]
    %v1283 = vld [vmem:[%s5 + $0x50] sm:$0xf]
    %v1284 = vld [vmem:[%s5 + $0x54] sm:$0xf]
    %v1285 = vld [vmem:[%s5 + $0x58] sm:$0xf]
    %v1286 = vld [vmem:[%s5 + $0x5c] sm:$0xf]
    %v1287 = vld [vmem:[%s5 + $0x60] sm:$0xf]
    %v1288 = vld [vmem:[%s5 + $0x64] sm:$0xf]
    %v1289 = vld [vmem:[%s5 + $0x68] sm:$0xf]
    %v1290 = vld [vmem:[%s5 + $0x6c] sm:$0xf]
    %v1291 = vld [vmem:[%s5 + $0x70] sm:$0xf]
    %v1292 = vld [vmem:[%s5 + $0x74] sm:$0xf]
    %v1293 = vld [vmem:[%s5 + $0x78] sm:$0xf]
    %v1294 = vld [vmem:[%s5 + $0x7c] sm:$0xf]
    %v1295 = vld [vmem:[%s6] sm:$0x1]
    %v1297 = vlaneseq
    %v1298 = vshrl.u32 %v1297, 7
    %v1299 = vsub.s32 0, %v1298
    %v1300 = vrot.slane %v1295, %v1299
    %v1334 = vunpack.c.l.b16 %v1263
    %v1335 = vunpack.c.l.b16 %v1264
    %v1336 = vunpack.c.l.b16 %v1265
    %v1337 = vunpack.c.l.b16 %v1266
    %v1338 = vunpack.c.l.b16 %v1267
    %v1339 = vunpack.c.l.b16 %v1268
    %v1340 = vunpack.c.l.b16 %v1269
    %v1341 = vunpack.c.l.b16 %v1270
    %v1342 = vunpack.c.l.b16 %v1271
    %v1343 = vunpack.c.l.b16 %v1272
    %v1344 = vunpack.c.l.b16 %v1273
    %v1345 = vunpack.c.l.b16 %v1274
    %v1346 = vunpack.c.l.b16 %v1275
    %v1347 = vunpack.c.l.b16 %v1276
    %v1348 = vunpack.c.l.b16 %v1277
    %v1349 = vunpack.c.l.b16 %v1278
    %v1350 = vunpack.c.l.b16 %v1279
    %v1351 = vunpack.c.l.b16 %v1280
    %v1352 = vunpack.c.l.b16 %v1281
    %v1353 = vunpack.c.l.b16 %v1282
    %v1354 = vunpack.c.l.b16 %v1283
    %v1355 = vunpack.c.l.b16 %v1284
    %v1356 = vunpack.c.l.b16 %v1285
    %v1357 = vunpack.c.l.b16 %v1286
    %v1358 = vunpack.c.l.b16 %v1287
    %v1359 = vunpack.c.l.b16 %v1288
    %v1360 = vunpack.c.l.b16 %v1289
    %v1361 = vunpack.c.l.b16 %v1290
    %v1362 = vunpack.c.l.b16 %v1291
    %v1363 = vunpack.c.l.b16 %v1292
    %v1364 = vunpack.c.l.b16 %v1293
    %v1365 = vunpack.c.l.b16 %v1294
    %v1366 = vpack.c.b16 %v1335, %v1334
    %v1367 = vpack.c.b16 %v1337, %v1336
    %v1368 = vpack.c.b16 %v1339, %v1338
    %v1369 = vpack.c.b16 %v1341, %v1340
    %v1370 = vpack.c.b16 %v1343, %v1342
    %v1371 = vpack.c.b16 %v1345, %v1344
    %v1372 = vpack.c.b16 %v1347, %v1346
    %v1373 = vpack.c.b16 %v1349, %v1348
    %v1374 = vpack.c.b16 %v1351, %v1350
    %v1375 = vpack.c.b16 %v1353, %v1352
    %v1376 = vpack.c.b16 %v1355, %v1354
    %v1377 = vpack.c.b16 %v1357, %v1356
    %v1378 = vpack.c.b16 %v1359, %v1358
    %v1379 = vpack.c.b16 %v1361, %v1360
    %v1380 = vpack.c.b16 %v1363, %v1362
    %v1381 = vpack.c.b16 %v1365, %v1364
    %1398 = vmatprep.subr.bf16.mxu0 0
    %1399 = vmatpush1.bf16.msra.mxu0 %v1366
    %1400 = vmatprep.subr.bf16.mxu0 0
    %1401 = vmatpush1.bf16.msra.mxu0 %v1367
    %1402 = vmatprep.subr.bf16.mxu0 0
    %1403 = vmatpush1.bf16.msra.mxu0 %v1368
    %1404 = vmatprep.subr.bf16.mxu0 0
    %1405 = vmatpush1.bf16.msra.mxu0 %v1369
    %1406 = vmatprep.subr.bf16.mxu0 0
    %1407 = vmatpush1.bf16.msra.mxu0 %v1370
    %1408 = vmatprep.subr.bf16.mxu0 0
    %1409 = vmatpush1.bf16.msra.mxu0 %v1371
    %1410 = vmatprep.subr.bf16.mxu0 0
    %1411 = vmatpush1.bf16.msra.mxu0 %v1372
    %1412 = vmatprep.subr.bf16.mxu0 0
    %1413 = vmatpush1.bf16.msra.mxu0 %v1373
    %1414 = vmatprep.subr.bf16.mxu0 0
    %1415 = vmatpush1.bf16.msra.mxu0 %v1374
    %1416 = vmatprep.subr.bf16.mxu0 0
    %1417 = vmatpush1.bf16.msra.mxu0 %v1375
    %1418 = vmatprep.subr.bf16.mxu0 0
    %1419 = vmatpush1.bf16.msra.mxu0 %v1376
    %1420 = vmatprep.subr.bf16.mxu0 0
    %1421 = vmatpush1.bf16.msra.mxu0 %v1377
    %1422 = vmatprep.subr.bf16.mxu0 0
    %1423 = vmatpush1.bf16.msra.mxu0 %v1378
    %1424 = vmatprep.subr.bf16.mxu0 0
    %1425 = vmatpush1.bf16.msra.mxu0 %v1379
    %1426 = vmatprep.subr.bf16.mxu0 0
    %1427 = vmatpush1.bf16.msra.mxu0 %v1380
    %1428 = vmatprep.subr.bf16.mxu0 0
    %1429 = vmatpush1.bf16.msra.mxu0 %v1381
    %1430 = vmatprep.mubr.bf16.mxu0 %v1248
    %1431 = vmatmul.mubr.bf16.gmra.mrb[0].mxu0 %v1247
    %v1432 = vpop.f32.mrb[0].mxu0
    %v1433 = vadd.f32 %v1300, %v1432
    %v1434 = vpop.f32.mrb[0].mxu0
    %v1435 = vpop.f32.mrb[0].mxu0
    %v1436 = vadd.f32 %v1300, %v1435
    %v1437 = vpop.f32.mrb[0].mxu0
    %1438 = vmatprep.mubr.bf16.mxu0 %v1250
    %1439 = vmatmul.mubr.bf16.gmra.mrb[0].mxu0 %v1249
    %v1440 = vpop.f32.mrb[0].mxu0
    %v1441 = vadd.f32 %v1300, %v1440
    %v1442 = vpop.f32.mrb[0].mxu0
    %v1443 = vpop.f32.mrb[0].mxu0
    %v1444 = vadd.f32 %v1300, %v1443
    %v1445 = vpop.f32.mrb[0].mxu0
    %1446 = vmatprep.mubr.bf16.mxu0 %v1252
    %1447 = vmatmul.mubr.bf16.gmra.mrb[0].mxu0 %v1251
    %v1448 = vpop.f32.mrb[0].mxu0
    %v1449 = vadd.f32 %v1300, %v1448
    %v1450 = vpop.f32.mrb[0].mxu0
    %v1451 = vpop.f32.mrb[0].mxu0
    %v1452 = vadd.f32 %v1300, %v1451
    %v1453 = vpop.f32.mrb[0].mxu0
    %1454 = vmatprep.mubr.bf16.mxu0 %v1254
    %1455 = vmatmul.mubr.bf16.gmra.mrb[0].mxu0 %v1253
    %v1456 = vpop.f32.mrb[0].mxu0
    %v1457 = vadd.f32 %v1300, %v1456
    %v1458 = vpop.f32.mrb[0].mxu0
    %v1459 = vpop.f32.mrb[0].mxu0
    %v1460 = vadd.f32 %v1300, %v1459
    %v1461 = vpop.f32.mrb[0].mxu0
    %1462 = vmatprep.mubr.bf16.mxu0 %v1256
    %1463 = vmatmul.mubr.bf16.gmra.mrb[0].mxu0 %v1255
    %v1464 = vpop.f32.mrb[0].mxu0
    %v1465 = vadd.f32 %v1300, %v1464
    %v1466 = vpop.f32.mrb[0].mxu0
    %v1467 = vpop.f32.mrb[0].mxu0
    %v1468 = vadd.f32 %v1300, %v1467
    %v1469 = vpop.f32.mrb[0].mxu0
    %1470 = vmatprep.mubr.bf16.mxu0 %v1258
    %1471 = vmatmul.mubr.bf16.gmra.mrb[0].mxu0 %v1257
    %v1472 = vpop.f32.mrb[0].mxu0
    %v1473 = vadd.f32 %v1300, %v1472
    %v1474 = vpop.f32.mrb[0].mxu0
    %v1475 = vpop.f32.mrb[0].mxu0
    %v1476 = vadd.f32 %v1300, %v1475
    %v1477 = vpop.f32.mrb[0].mxu0
    %1478 = vmatprep.mubr.bf16.mxu0 %v1260
    %1479 = vmatmul.mubr.bf16.gmra.mrb[0].mxu0 %v1259
    %v1480 = vpop.f32.mrb[0].mxu0
    %v1481 = vadd.f32 %v1300, %v1480
    %v1482 = vpop.f32.mrb[0].mxu0
    %v1483 = vpop.f32.mrb[0].mxu0
    %v1484 = vadd.f32 %v1300, %v1483
    %v1485 = vpop.f32.mrb[0].mxu0
    %1486 = vmatprep.mubr.bf16.mxu0 %v1262
    %1487 = vmatmul.mubr.bf16.gmra.mrb[0].mxu0 %v1261
    %v1488 = vpop.f32.mrb[0].mxu0
    %v1489 = vadd.f32 %v1300, %v1488
    %v1490 = vpop.f32.mrb[0].mxu0
    %v1491 = vpop.f32.mrb[0].mxu0
    %v1492 = vadd.f32 %v1300, %v1491
    %v1493 = vpop.f32.mrb[0].mxu0
    %1494 = vdwg.mxu0
    %1495 = vst [vmem:[#allocation7] sm:$0xff] %v1433
    %1496 = vst [vmem:[#allocation7 + $0x8] sm:$0xff] %v1436
    %1497 = vst [vmem:[#allocation7 + $0x10] sm:$0xff] %v1441
    %1498 = vst [vmem:[#allocation7 + $0x18] sm:$0xff] %v1444
    %1499 = vst [vmem:[#allocation7 + $0x20] sm:$0xff] %v1449
    %1500 = vst [vmem:[#allocation7 + $0x28] sm:$0xff] %v1452
    %1501 = vst [vmem:[#allocation7 + $0x30] sm:$0xff] %v1457
    %1502 = vst [vmem:[#allocation7 + $0x38] sm:$0xff] %v1460
    %1503 = vst [vmem:[#allocation7 + $0x40] sm:$0xff] %v1465
    %1504 = vst [vmem:[#allocation7 + $0x48] sm:$0xff] %v1468
    %1505 = vst [vmem:[#allocation7 + $0x50] sm:$0xff] %v1473
    %1506 = vst [vmem:[#allocation7 + $0x58] sm:$0xff] %v1476
    %1507 = vst [vmem:[#allocation7 + $0x60] sm:$0xff] %v1481
    %1508 = vst [vmem:[#allocation7 + $0x68] sm:$0xff] %v1484
    %1509 = vst [vmem:[#allocation7 + $0x70] sm:$0xff] %v1489
    %1510 = vst [vmem:[#allocation7 + $0x78] sm:$0xff] %v1492
    // Predicated region
    $region38: #{tpu_custom_call.1} parent=1 // pred_check
      _
    $region39: #{tpu_custom_call.1} parent=1 // pred_check_branch
      %1512 = sbr.rel (0) target = $region41
    $region40: #{tpu_custom_call.1} parent=1 // pred_region
      %s1514 = ssub.s32 2048, 2048
      %1515 = vsyncadd [#allocation4], %s1514
      %s1516 = sshll.u32 [#allocation7], 4
      %s1517 = int_to_ptr.vmem [resolvable:$true] %s1516
      %1522 = dma.vmem_to_hbm [thread:$0]  %s1517, 2048, %s7, [#allocation4], 128, 128, 8
    $region41: #{tpu_custom_call.1} parent=1 // pred_fallthru
      _
    // Predicated region
    $region42: #{tpu_custom_call.1} parent=1 // pred_check
      _
    $region43: #{tpu_custom_call.1} parent=1 // pred_check_branch
      %1524 = sbr.rel (0) target = $region45
    $region44: #{tpu_custom_call.1} parent=1 // pred_region
      %1525 = dma.done [#allocation4], 2048
    $region45: #{tpu_custom_call.1} parent=1 // pred_fallthru
      _
    %1526 = vsyncpa [#allocation3], 1
    %1527 = vsyncpa [#allocation6], 1
    %1528 = vsyncpa [#allocation4], 1

</llo_original>
